<compile_context>
chip_gen: v7x
topology: tpu7x:2x2x1
jax: 0.10.0
libtpu: 0.0.40
codegen_flags: <defaults>
</compile_context>

<pallas_src>
import math
from functools import partial

import jax
import jax.numpy as jnp
from jax import lax
from jax.experimental import pallas as pl
from jax.experimental.pallas import tpu as pltpu

_INV_SQRT2 = 1.0 / math.sqrt(2.0)
_LANE = 128
_SUBLANE = 8


def _round_up(x, m):
    return (x + m - 1) // m * m


def _mlp_kernel(x_ref, w1_ref, b1_ref, w2_ref, b2_ref, o_ref):
    # linear1: [TM, H] @ [H, D], f32 accumulation on the MXU.
    h = jnp.dot(x_ref[...], w1_ref[...], preferred_element_type=jnp.float32)
    h = h + b1_ref[...].astype(jnp.float32)
    # Exact GELU (PyTorch nn.GELU default): 0.5*x*(1+erf(x/sqrt(2))), in f32.
    g = 0.5 * h * (1.0 + lax.erf(h * _INV_SQRT2))
    # drop1: rate = 0.0 -> identity.
    # linear2: [TM, D] @ [D, H], f32 accumulation on the MXU.
    g = g.astype(w2_ref.dtype)
    out = jnp.dot(g, w2_ref[...], preferred_element_type=jnp.float32)
    out = out + b2_ref[...].astype(jnp.float32)
    # drop2: rate = 0.0 -> identity.
    o_ref[...] = out.astype(o_ref.dtype)


def _pick_tm(m_pad_min, h_p, d_p, in_bytes, w_bytes, out_bytes,
             budget_bytes=48 * (1 << 20)):
    """Largest M-tile (multiple of 8, <=512) whose working set fits the budget."""
    tm = min(512, m_pad_min)
    while True:
        need = (2 * 2 * h_p * d_p * w_bytes      # w1 + w2 (worst-case 2 buffers)
                + 2 * tm * h_p * in_bytes        # double-buffered x tile
                + 2 * tm * h_p * out_bytes       # double-buffered out tile
                + 2 * tm * d_p * 4)              # f32 intermediates (h, g)
        if need <= budget_bytes or tm <= _SUBLANE:
            # TODO(synk): if resident weights alone exceed the budget
            # (very large mlp_dim), add a D (reduction) grid axis with a
            # pl.when-initialized accumulator instead of shrinking TM further.
            return tm, need
        tm = max(_SUBLANE, _round_up(tm // 2, _SUBLANE))


@partial(jax.jit, static_argnames=("use_bf16",))
def mlp_block(x, w1, b1, w2, b2, use_bf16=False):
    """x: [B, N, H]; w1: [H, D]; b1: [D]; w2: [D, H]; b2: [H]."""
    B, N, H = x.shape
    D = w1.shape[1]
    M = B * N
    out_dtype = x.dtype

    if use_bf16:
        # bf16 matmul inputs, f32 accumulation / bias / GELU inside the kernel.
        x = x.astype(jnp.bfloat16)
        w1 = w1.astype(jnp.bfloat16)
        w2 = w2.astype(jnp.bfloat16)

    # Lane-dense (multiple-of-128) feature dims; zero padding is exact.
    H_p = _round_up(H, _LANE)
    D_p = _round_up(D, _LANE)

    m_pad_min = _round_up(M, _SUBLANE)
    TM, vmem_need = _pick_tm(
        m_pad_min, H_p, D_p,
        jnp.dtype(x.dtype).itemsize,
        jnp.dtype(w1.dtype).itemsize,
        jnp.dtype(out_dtype).itemsize)
    M_p = _round_up(M, TM)

    x2d = jnp.pad(x.reshape(M, H), ((0, M_p - M), (0, H_p - H)))
    w1_p = jnp.pad(w1, ((0, H_p - H), (0, D_p - D)))
    b1_p = jnp.pad(b1, (0, D_p - D)).reshape(1, D_p)
    w2_p = jnp.pad(w2, ((0, D_p - D), (0, H_p - H)))
    b2_p = jnp.pad(b2, (0, H_p - H)).reshape(1, H_p)

    grid = (M_p // TM,)

    cost = pl.CostEstimate(
        flops=4 * M_p * H_p * D_p,            # two matmuls (2 flops/MAC each)
        transcendentals=M_p * D_p,            # erf in GELU
        bytes_accessed=(x2d.size * x2d.dtype.itemsize
                        + w1_p.size * w1_p.dtype.itemsize
                        + w2_p.size * w2_p.dtype.itemsize
                        + (b1_p.size + b2_p.size) * 4
                        + M_p * H_p * jnp.dtype(out_dtype).itemsize))

    vmem_limit = int(min(max(int(vmem_need * 1.25) + (1 << 20), 32 * (1 << 20)),
                         100 * (1 << 20)))

    out2d = pl.pallas_call(
        _mlp_kernel,
        out_shape=jax.ShapeDtypeStruct((M_p, H_p), out_dtype),
        grid_spec=pltpu.PrefetchScalarGridSpec(
            num_scalar_prefetch=0,
            grid=grid,
            in_specs=[
                pl.BlockSpec((TM, H_p), lambda i: (i, 0)),   # x: streamed per tile
                pl.BlockSpec((H_p, D_p), lambda i: (0, 0)),  # w1: VMEM-resident
                pl.BlockSpec((1, D_p), lambda i: (0, 0)),    # b1: VMEM-resident
                pl.BlockSpec((D_p, H_p), lambda i: (0, 0)),  # w2: VMEM-resident
                pl.BlockSpec((1, H_p), lambda i: (0, 0)),    # b2: VMEM-resident
            ],
            out_specs=pl.BlockSpec((TM, H_p), lambda i: (i, 0)),
        ),
        compiler_params=pltpu.CompilerParams(
            dimension_semantics=("parallel",),  # split M-tiles across TCs on v7x
            vmem_limit_bytes=vmem_limit,
        ),
        cost_estimate=cost,
    )(x2d, w1_p, b1_p, w2_p, b2_p)

    return out2d[:M, :H].reshape(B, N, H)


def _reference(x, w1, b1, w2, b2):
    h = jnp.dot(x, w1) + b1
    g = 0.5 * h * (1.0 + lax.erf(h / jnp.sqrt(2.0)))
    return jnp.dot(g, w2) + b2


if __name__ == "__main__":
    # Small shapes consistent with the module: hidden_size=32, mlp_dim=64,
    # dropout_rate=0.0 (identity), tokens [B=2, N=8, H=32].
    B, N, H, D = 2, 8, 32, 64

    key = jax.random.PRNGKey(0)
    kx, kw1, kb1, kw2, kb2 = jax.random.split(key, 5)

    x = jax.random.normal(kx, (B, N, H), dtype=jnp.float32)

    # Deterministic param init (PyTorch nn.Linear-style uniform bounds).
    bound1 = 1.0 / math.sqrt(H)
    w1 = jax.random.uniform(kw1, (H, D), minval=-bound1, maxval=bound1,
                            dtype=jnp.float32)
    b1 = jax.random.uniform(kb1, (D,), minval=-bound1, maxval=bound1,
                            dtype=jnp.float32)
    bound2 = 1.0 / math.sqrt(D)
    w2 = jax.random.uniform(kw2, (D, H), minval=-bound2, maxval=bound2,
                            dtype=jnp.float32)
    b2 = jax.random.uniform(kb2, (H,), minval=-bound2, maxval=bound2,
                            dtype=jnp.float32)

    ref = _reference(x, w1, b1, w2, b2)

    # f32 path: must match the PyTorch-equivalent reference tightly.
    out = mlp_block(x, w1, b1, w2, b2)
    jax.block_until_ready(out)
    assert out.shape == (B, N, H)
    assert jnp.allclose(out, ref, atol=1e-4, rtol=1e-4)

    # bf16 matmul path (v6e/v7x throughput option): loose tolerance.
    out_bf16 = mlp_block(x, w1, b1, w2, b2, use_bf16=True)
    jax.block_until_ready(out_bf16)
    assert out_bf16.shape == (B, N, H)
    assert jnp.allclose(out_bf16, ref, atol=5e-2, rtol=5e-2)

    print("KERNEL_OK")
</pallas_src>

<mosaic_0001>
module attributes {stable_mosaic.version = 11 : i64} {
  func.func @_mlp_kernel(%arg0: i32, %arg1: memref<16x128xf32, #tpu.memory_space<vmem>>, %arg2: memref<128x128xf32, #tpu.memory_space<vmem>>, %arg3: memref<1x128xf32, #tpu.memory_space<vmem>>, %arg4: memref<128x128xf32, #tpu.memory_space<vmem>>, %arg5: memref<1x128xf32, #tpu.memory_space<vmem>>, %arg6: memref<16x128xf32, #tpu.memory_space<vmem>>) attributes {dimension_semantics = [#tpu.dimension_semantics<parallel>], iteration_bounds = array<i64: 1>, scalar_prefetch = 0 : i64, scratch_operands = 0 : i64, tpu.core_type = #tpu.core_type<tc>, window_params = [{transform_indices = @transform_0, window_bounds = array<i64: 16, 128>}, {pipeline_mode = #tpu.pipeline_mode<synchronous>, transform_indices = @transform_1, window_bounds = array<i64: 128, 128>}, {pipeline_mode = #tpu.pipeline_mode<synchronous>, transform_indices = @transform_2, window_bounds = array<i64: 1, 128>}, {pipeline_mode = #tpu.pipeline_mode<synchronous>, transform_indices = @transform_3, window_bounds = array<i64: 128, 128>}, {pipeline_mode = #tpu.pipeline_mode<synchronous>, transform_indices = @transform_4, window_bounds = array<i64: 1, 128>}, {transform_indices = @transform_5, window_bounds = array<i64: 16, 128>}]} {
    %c0 = arith.constant 0 : index
    %c0_0 = arith.constant 0 : index
    %0 = vector.load %arg1[%c0, %c0_0] : memref<16x128xf32, #tpu.memory_space<vmem>>, vector<16x128xf32>
    %c0_1 = arith.constant 0 : index
    %c0_2 = arith.constant 0 : index
    %1 = vector.load %arg2[%c0_1, %c0_2] : memref<128x128xf32, #tpu.memory_space<vmem>>, vector<128x128xf32>
    %cst = arith.constant dense<0.000000e+00> : vector<16x128xf32>
    %2 = tpu.matmul %0, %1, %cst {dimension_numbers = #tpu.dot_dimension_numbers<[1], [0], [0], [1], [0, 0, 1, 1], [], []>} : vector<16x128xf32>, vector<128x128xf32>, vector<16x128xf32> -> vector<16x128xf32>
    %c0_3 = arith.constant 0 : index
    %c0_4 = arith.constant 0 : index
    %3 = vector.load %arg3[%c0_3, %c0_4] : memref<1x128xf32, #tpu.memory_space<vmem>>, vector<1x128xf32>
    %4 = vector.broadcast %3 : vector<1x128xf32> to vector<16x128xf32>
    %5 = arith.addf %2, %4 : vector<16x128xf32>
    %cst_5 = arith.constant 5.000000e-01 : f32
    %6 = vector.broadcast %cst_5 : f32 to vector<16x128xf32>
    %7 = arith.mulf %6, %5 : vector<16x128xf32>
    %cst_6 = arith.constant 0.707106769 : f32
    %8 = vector.broadcast %cst_6 : f32 to vector<16x128xf32>
    %9 = arith.mulf %5, %8 : vector<16x128xf32>
    %10 = math.erf %9 : vector<16x128xf32>
    %cst_7 = arith.constant 1.000000e+00 : f32
    %11 = vector.broadcast %cst_7 : f32 to vector<16x128xf32>
    %12 = arith.addf %11, %10 : vector<16x128xf32>
    %13 = arith.mulf %7, %12 : vector<16x128xf32>
    %c0_8 = arith.constant 0 : index
    %c0_9 = arith.constant 0 : index
    %14 = vector.load %arg4[%c0_8, %c0_9] : memref<128x128xf32, #tpu.memory_space<vmem>>, vector<128x128xf32>
    %cst_10 = arith.constant dense<0.000000e+00> : vector<16x128xf32>
    %15 = tpu.matmul %13, %14, %cst_10 {dimension_numbers = #tpu.dot_dimension_numbers<[1], [0], [0], [1], [0, 0, 1, 1], [], []>} : vector<16x128xf32>, vector<128x128xf32>, vector<16x128xf32> -> vector<16x128xf32>
    %c0_11 = arith.constant 0 : index
    %c0_12 = arith.constant 0 : index
    %16 = vector.load %arg5[%c0_11, %c0_12] : memref<1x128xf32, #tpu.memory_space<vmem>>, vector<1x128xf32>
    %17 = vector.broadcast %16 : vector<1x128xf32> to vector<16x128xf32>
    %18 = arith.addf %15, %17 : vector<16x128xf32>
    %c0_13 = arith.constant 0 : index
    %c0_14 = arith.constant 0 : index
    %19 = vector.load %arg6[%c0_13, %c0_14] : memref<16x128xf32, #tpu.memory_space<vmem>>, vector<16x128xf32>
    tpu.vector_store %arg6[%c0_13, %c0_14], %18 {strides = array<i32>} : memref<16x128xf32, #tpu.memory_space<vmem>>, vector<16x128xf32>,
    return
  }
  func.func @transform_0(%arg0: i32) -> (i32, i32) {
    %c0_i32 = arith.constant 0 : i32
    %c0_i32_0 = arith.constant 0 : i32
    return %arg0, %c0_i32 : i32, i32
  }
  func.func @transform_1(%arg0: i32) -> (i32, i32) {
    %c0_i32 = arith.constant 0 : i32
    %c0_i32_0 = arith.constant 0 : i32
    %c0_i32_1 = arith.constant 0 : i32
    return %c0_i32, %c0_i32_0 : i32, i32
  }
  func.func @transform_2(%arg0: i32) -> (i32, i32) {
    %c0_i32 = arith.constant 0 : i32
    %c0_i32_0 = arith.constant 0 : i32
    %c0_i32_1 = arith.constant 0 : i32
    return %c0_i32, %c0_i32_0 : i32, i32
  }
  func.func @transform_3(%arg0: i32) -> (i32, i32) {
    %c0_i32 = arith.constant 0 : i32
    %c0_i32_0 = arith.constant 0 : i32
    %c0_i32_1 = arith.constant 0 : i32
    return %c0_i32, %c0_i32_0 : i32, i32
  }
  func.func @transform_4(%arg0: i32) -> (i32, i32) {
    %c0_i32 = arith.constant 0 : i32
    %c0_i32_0 = arith.constant 0 : i32
    %c0_i32_1 = arith.constant 0 : i32
    return %c0_i32, %c0_i32_0 : i32, i32
  }
  func.func @transform_5(%arg0: i32) -> (i32, i32) {
    %c0_i32 = arith.constant 0 : i32
    %c0_i32_0 = arith.constant 0 : i32
    return %arg0, %c0_i32 : i32, i32
  }
}

</mosaic_0001>

<llo_original>
// kernel: mlp_block.1
$region0: #{mlp_block.1}
  #allocation0 [shape = 'u32[]', space=smem, size = 0x4, offset = 0x4, fixed_abs, tag = 'smem constant byte address 0x4 - core index']
  #allocation1 [shape = 'u32[144,128]{1,0:T(1,128)}', space=vmem, size = 0x12000, scoped, tag = 'internal scratch']
  %s0 = inlined_call_operand.vmem [shape: f32[16,128], index: 0, kind: input, shape index: {}]
  %s1 = inlined_call_operand.vmem [shape: f32[128,128], index: 1, kind: input, shape index: {}]
  %s2 = inlined_call_operand.vmem [shape: f32[1,128], index: 2, kind: input, shape index: {}]
  %s3 = inlined_call_operand.vmem [shape: f32[128,128], index: 3, kind: input, shape index: {}]
  %s4 = inlined_call_operand.vmem [shape: f32[1,128], index: 4, kind: input, shape index: {}]
  %s5 = inlined_call_operand.vmem [shape: f32[16,128], index: 5, kind: output, shape index: {}]
  %s6 = sld [smem:[#allocation0]]
  $region30: #{mlp_block.1} parent=0
    _
  %s8 = ssub.s32 1, %s6
  %s9 = scalar_select 0, %s8, %s6
  // Predicated region
  $region2: #{mlp_block.1} parent=0 // pred_check
    _
  $region3: #{mlp_block.1} parent=0 // pred_check_branch
    %11 = sbr.rel (0) target = $region5
  $region4: #{mlp_block.1} parent=0 // pred_region
    _
  $region5: #{mlp_block.1} parent=0 // pred_fallthru
    _
  // Predicated region
  $region6: #{mlp_block.1} parent=0 // pred_check
    _
  $region7: #{mlp_block.1} parent=0 // pred_check_branch
    %13 = sbr.rel (0) target = $region9
  $region8: #{mlp_block.1} parent=0 // pred_region
    _
  $region9: #{mlp_block.1} parent=0 // pred_fallthru
    _
  // Predicated region
  $region10: #{mlp_block.1} parent=0 // pred_check
    _
  $region11: #{mlp_block.1} parent=0 // pred_check_branch
    %15 = sbr.rel (0) target = $region13
  $region12: #{mlp_block.1} parent=0 // pred_region
    _
  $region13: #{mlp_block.1} parent=0 // pred_fallthru
    _
  // Predicated region
  $region14: #{mlp_block.1} parent=0 // pred_check
    _
  $region15: #{mlp_block.1} parent=0 // pred_check_branch
    %17 = sbr.rel (0) target = $region17
  $region16: #{mlp_block.1} parent=0 // pred_region
    _
  $region17: #{mlp_block.1} parent=0 // pred_fallthru
    _
  // Predicated region
  $region18: #{mlp_block.1} parent=0 // pred_check
    _
  $region19: #{mlp_block.1} parent=0 // pred_check_branch
    %19 = sbr.rel (0) target = $region21
  $region20: #{mlp_block.1} parent=0 // pred_region
    _
  $region21: #{mlp_block.1} parent=0 // pred_fallthru
    _
  %v20 = vld [vmem:[%s0] sm:$0xff]
  %v21 = vld [vmem:[%s0 + $0x8] sm:$0xff]
  %v22 = vld [vmem:[%s1] sm:$0xff]
  %v23 = vld [vmem:[%s1 + $0x8] sm:$0xff]
  %v24 = vld [vmem:[%s1 + $0x10] sm:$0xff]
  %v25 = vld [vmem:[%s1 + $0x18] sm:$0xff]
  %v26 = vld [vmem:[%s1 + $0x20] sm:$0xff]
  %v27 = vld [vmem:[%s1 + $0x28] sm:$0xff]
  %v28 = vld [vmem:[%s1 + $0x30] sm:$0xff]
  %v29 = vld [vmem:[%s1 + $0x38] sm:$0xff]
  %v30 = vld [vmem:[%s1 + $0x40] sm:$0xff]
  %v31 = vld [vmem:[%s1 + $0x48] sm:$0xff]
  %v32 = vld [vmem:[%s1 + $0x50] sm:$0xff]
  %v33 = vld [vmem:[%s1 + $0x58] sm:$0xff]
  %v34 = vld [vmem:[%s1 + $0x60] sm:$0xff]
  %v35 = vld [vmem:[%s1 + $0x68] sm:$0xff]
  %v36 = vld [vmem:[%s1 + $0x70] sm:$0xff]
  %v37 = vld [vmem:[%s1 + $0x78] sm:$0xff]
  %v38 = vld [vmem:[%s2] sm:$0x1]
  %v40 = vlaneseq
  %v41 = vshrl.u32 %v40, 7
  %v42 = vsub.s32 0, %v41
  %v43 = vrot.slane %v38, %v42
  %45 = vmatprep.subr.mxu0 0.0
  %46 = vmatpush1.msra.mxu0 %v22
  %47 = vmatprep.subr.mxu0 0.0
  %48 = vmatpush1.msra.mxu0 %v23
  %49 = vmatprep.subr.mxu0 0.0
  %50 = vmatpush1.msra.mxu0 %v24
  %51 = vmatprep.subr.mxu0 0.0
  %52 = vmatpush1.msra.mxu0 %v25
  %53 = vmatprep.subr.mxu0 0.0
  %54 = vmatpush1.msra.mxu0 %v26
  %55 = vmatprep.subr.mxu0 0.0
  %56 = vmatpush1.msra.mxu0 %v27
  %57 = vmatprep.subr.mxu0 0.0
  %58 = vmatpush1.msra.mxu0 %v28
  %59 = vmatprep.subr.mxu0 0.0
  %60 = vmatpush1.msra.mxu0 %v29
  %61 = vmatprep.subr.mxu0 0.0
  %62 = vmatpush1.msra.mxu0 %v30
  %63 = vmatprep.subr.mxu0 0.0
  %64 = vmatpush1.msra.mxu0 %v31
  %65 = vmatprep.subr.mxu0 0.0
  %66 = vmatpush1.msra.mxu0 %v32
  %67 = vmatprep.subr.mxu0 0.0
  %68 = vmatpush1.msra.mxu0 %v33
  %69 = vmatprep.subr.mxu0 0.0
  %70 = vmatpush1.msra.mxu0 %v34
  %71 = vmatprep.subr.mxu0 0.0
  %72 = vmatpush1.msra.mxu0 %v35
  %73 = vmatprep.subr.mxu0 0.0
  %74 = vmatpush1.msra.mxu0 %v36
  %75 = vmatprep.subr.mxu0 0.0
  %76 = vmatpush1.msra.mxu0 %v37
  %77 = vmatprep.subr.mxu0 0.0
  %78 = vmatpush1.msra.mxu0 0.0
  %79 = vmatprep.subr.mxu0 0.0
  %80 = vmatpush1.msra.mxu0 0.0
  %81 = vmatprep.subr.mxu0 0.0
  %82 = vmatpush1.msra.mxu0 0.0
  %83 = vmatprep.subr.mxu0 0.0
  %84 = vmatpush1.msra.mxu0 0.0
  %85 = vmatprep.subr.mxu0 0.0
  %86 = vmatpush1.msra.mxu0 0.0
  %87 = vmatprep.subr.mxu0 0.0
  %88 = vmatpush1.msra.mxu0 0.0
  %89 = vmatprep.subr.mxu0 0.0
  %90 = vmatpush1.msra.mxu0 0.0
  %91 = vmatprep.subr.mxu0 0.0
  %92 = vmatpush1.msra.mxu0 0.0
  %93 = vmatprep.subr.mxu0 0.0
  %94 = vmatpush1.msra.mxu0 0.0
  %95 = vmatprep.subr.mxu0 0.0
  %96 = vmatpush1.msra.mxu0 0.0
  %97 = vmatprep.subr.mxu0 0.0
  %98 = vmatpush1.msra.mxu0 0.0
  %99 = vmatprep.subr.mxu0 0.0
  %100 = vmatpush1.msra.mxu0 0.0
  %101 = vmatprep.subr.mxu0 0.0
  %102 = vmatpush1.msra.mxu0 0.0
  %103 = vmatprep.subr.mxu0 0.0
  %104 = vmatpush1.msra.mxu0 0.0
  %105 = vmatprep.subr.mxu0 0.0
  %106 = vmatpush1.msra.mxu0 0.0
  %107 = vmatprep.subr.mxu0 0.0
  %108 = vmatpush1.msra.mxu0 0.0
  %109 = vmatprep.mubr.f32.mxu0 0.0
  %110 = vmatmul.mubr.f32.gmra.mrb[0].mxu0 %v20
  %v111 = vpop.f32.mrb[0].mxu0
  %v112 = vadd.f32 %v43, %v111
  %v113 = vpop.f32.mrb[0].mxu0
  %114 = vmatprep.mubr.f32.mxu0 0.0
  %115 = vmatmul.mubr.f32.gmra.mrb[0].mxu0 %v21
  %v116 = vpop.f32.mrb[0].mxu0
  %v117 = vadd.f32 %v43, %v116
  %v118 = vpop.f32.mrb[0].mxu0
  %119 = vdwg.mxu0
  %v120 = vmul.f32 %v112, 0.5
  %v121 = vmul.f32 %v117, 0.5
  %v122 = vmul.f32 %v112, 0.70710677
  %v123 = vmul.f32 %v117, 0.70710677
  %v124 = verf.f32.pop %v122
  %v125 = verf.f32.pop %v123
  %v126 = vadd.f32 %v124, 1.0
  %v127 = vadd.f32 %v125, 1.0
  %v128 = vmul.f32 %v120, %v126
  %v129 = vmul.f32 %v121, %v127
  %v130 = vld [vmem:[%s3] sm:$0xff]
  %v131 = vld [vmem:[%s3 + $0x8] sm:$0xff]
  %v132 = vld [vmem:[%s3 + $0x10] sm:$0xff]
  %v133 = vld [vmem:[%s3 + $0x18] sm:$0xff]
  %v134 = vld [vmem:[%s3 + $0x20] sm:$0xff]
  %v135 = vld [vmem:[%s3 + $0x28] sm:$0xff]
  %v136 = vld [vmem:[%s3 + $0x30] sm:$0xff]
  %v137 = vld [vmem:[%s3 + $0x38] sm:$0xff]
  %v138 = vld [vmem:[%s3 + $0x40] sm:$0xff]
  %v139 = vld [vmem:[%s3 + $0x48] sm:$0xff]
  %v140 = vld [vmem:[%s3 + $0x50] sm:$0xff]
  %v141 = vld [vmem:[%s3 + $0x58] sm:$0xff]
  %v142 = vld [vmem:[%s3 + $0x60] sm:$0xff]
  %v143 = vld [vmem:[%s3 + $0x68] sm:$0xff]
  %v144 = vld [vmem:[%s3 + $0x70] sm:$0xff]
  %v145 = vld [vmem:[%s3 + $0x78] sm:$0xff]
  %v146 = vld [vmem:[%s4] sm:$0x1]
  %v148 = vlaneseq
  %v149 = vshrl.u32 %v148, 7
  %v150 = vsub.s32 0, %v149
  %v151 = vrot.slane %v146, %v150
  %153 = vmatprep.subr.mxu0 0.0
  %154 = vmatpush1.msra.mxu0 %v130
  %155 = vmatprep.subr.mxu0 0.0
  %156 = vmatpush1.msra.mxu0 %v131
  %157 = vmatprep.subr.mxu0 0.0
  %158 = vmatpush1.msra.mxu0 %v132
  %159 = vmatprep.subr.mxu0 0.0
  %160 = vmatpush1.msra.mxu0 %v133
  %161 = vmatprep.subr.mxu0 0.0
  %162 = vmatpush1.msra.mxu0 %v134
  %163 = vmatprep.subr.mxu0 0.0
  %164 = vmatpush1.msra.mxu0 %v135
  %165 = vmatprep.subr.mxu0 0.0
  %166 = vmatpush1.msra.mxu0 %v136
  %167 = vmatprep.subr.mxu0 0.0
  %168 = vmatpush1.msra.mxu0 %v137
  %169 = vmatprep.subr.mxu0 0.0
  %170 = vmatpush1.msra.mxu0 %v138
  %171 = vmatprep.subr.mxu0 0.0
  %172 = vmatpush1.msra.mxu0 %v139
  %173 = vmatprep.subr.mxu0 0.0
  %174 = vmatpush1.msra.mxu0 %v140
  %175 = vmatprep.subr.mxu0 0.0
  %176 = vmatpush1.msra.mxu0 %v141
  %177 = vmatprep.subr.mxu0 0.0
  %178 = vmatpush1.msra.mxu0 %v142
  %179 = vmatprep.subr.mxu0 0.0
  %180 = vmatpush1.msra.mxu0 %v143
  %181 = vmatprep.subr.mxu0 0.0
  %182 = vmatpush1.msra.mxu0 %v144
  %183 = vmatprep.subr.mxu0 0.0
  %184 = vmatpush1.msra.mxu0 %v145
  %185 = vmatprep.subr.mxu0 0.0
  %186 = vmatpush1.msra.mxu0 0.0
  %187 = vmatprep.subr.mxu0 0.0
  %188 = vmatpush1.msra.mxu0 0.0
  %189 = vmatprep.subr.mxu0 0.0
  %190 = vmatpush1.msra.mxu0 0.0
  %191 = vmatprep.subr.mxu0 0.0
  %192 = vmatpush1.msra.mxu0 0.0
  %193 = vmatprep.subr.mxu0 0.0
  %194 = vmatpush1.msra.mxu0 0.0
  %195 = vmatprep.subr.mxu0 0.0
  %196 = vmatpush1.msra.mxu0 0.0
  %197 = vmatprep.subr.mxu0 0.0
  %198 = vmatpush1.msra.mxu0 0.0
  %199 = vmatprep.subr.mxu0 0.0
  %200 = vmatpush1.msra.mxu0 0.0
  %201 = vmatprep.subr.mxu0 0.0
  %202 = vmatpush1.msra.mxu0 0.0
  %203 = vmatprep.subr.mxu0 0.0
  %204 = vmatpush1.msra.mxu0 0.0
  %205 = vmatprep.subr.mxu0 0.0
  %206 = vmatpush1.msra.mxu0 0.0
  %207 = vmatprep.subr.mxu0 0.0
  %208 = vmatpush1.msra.mxu0 0.0
  %209 = vmatprep.subr.mxu0 0.0
  %210 = vmatpush1.msra.mxu0 0.0
  %211 = vmatprep.subr.mxu0 0.0
  %212 = vmatpush1.msra.mxu0 0.0
  %213 = vmatprep.subr.mxu0 0.0
  %214 = vmatpush1.msra.mxu0 0.0
  %215 = vmatprep.subr.mxu0 0.0
  %216 = vmatpush1.msra.mxu0 0.0
  %217 = vmatprep.mubr.f32.mxu0 0.0
  %218 = vmatmul.mubr.f32.gmra.mrb[0].mxu0 %v128
  %v219 = vpop.f32.mrb[0].mxu0
  %v220 = vadd.f32 %v151, %v219
  %v221 = vpop.f32.mrb[0].mxu0
  %222 = vmatprep.mubr.f32.mxu0 0.0
  %223 = vmatmul.mubr.f32.gmra.mrb[0].mxu0 %v129
  %v224 = vpop.f32.mrb[0].mxu0
  %v225 = vadd.f32 %v151, %v224
  %v226 = vpop.f32.mrb[0].mxu0
  %227 = vdwg.mxu0
  %228 = vst [vmem:[%s5] sm:$0xff] %v220
  %229 = vst [vmem:[%s5 + $0x8] sm:$0xff] %v225
  // Predicated region
  $region22: #{mlp_block.1} parent=0 // pred_check
    _
  $region23: #{mlp_block.1} parent=0 // pred_check_branch
    %231 = sbr.rel (0) target = $region25
  $region24: #{mlp_block.1} parent=0 // pred_region
    _
  $region25: #{mlp_block.1} parent=0 // pred_fallthru
    _
  // Predicated region
  $region26: #{mlp_block.1} parent=0 // pred_check
    _
  $region27: #{mlp_block.1} parent=0 // pred_check_branch
    %233 = sbr.rel (0) target = $region29
  $region28: #{mlp_block.1} parent=0 // pred_region
    _
  $region29: #{mlp_block.1} parent=0 // pred_fallthru
    _

</llo_original>
